<compile_context>
chip_gen: v6e
topology: v6e:2x2x1
jax: 0.10.0
libtpu: 0.0.40
codegen_flags: <defaults>
</compile_context>

<pallas_src>
import functools
import math

import jax
import jax.numpy as jnp
from jax.experimental import pallas as pl
from jax.experimental.pallas import tpu as pltpu


def _sdpa_kernel(q_ref, k_ref, v_ref, *rest, scale, has_mask, return_attn):
    """One (batch, head, q-tile) step. Refs are 2-D after squeezing (b, h)."""
    rest = list(rest)
    m_ref = rest.pop(0) if has_mask else None
    ctx_ref = rest.pop(0)
    attn_ref = rest.pop(0) if return_attn else None

    # Fold 1/sqrt(d_k) into the (tq, d_k) Q tile (cheaper than scaling the
    # (tq, S) scores); keep the native dtype so bf16 stays on the bf16 MXU path.
    q = q_ref[...] * jnp.asarray(scale, dtype=q_ref.dtype)   # (tq, d_k)
    k = k_ref[...]                                           # (S,  d_k)

    # scores = Q @ K^T without materializing K^T: contract the trailing d_k dim
    # of both operands, accumulate in f32 on the MXU.
    scores = jax.lax.dot_general(
        q, k,
        dimension_numbers=(((1,), (1,)), ((), ())),
        preferred_element_type=jnp.float32,
    )                                                        # (tq, S) f32

    if has_mask:
        keep = m_ref[...] != 0                               # broadcastable
        scores = jnp.where(keep, scores, jnp.float32(-1.0e9))

    # Numerically stable softmax over keys, in f32.
    # (Fully-masked rows become uniform, matching softmax-after-masked_fill.)
    scores = scores - jnp.max(scores, axis=-1, keepdims=True)
    p = jnp.exp(scores)
    denom = jnp.sum(p, axis=-1, keepdims=True)
    attn = p * pl.reciprocal(denom, approx=True)             # EUP vrcp slot

    # context = attn @ V; feed the MXU in V's dtype (bf16 stays bf16).
    ctx = jnp.dot(attn.astype(v_ref.dtype), v_ref[...],
                  preferred_element_type=jnp.float32)        # (tq, d_k)

    ctx_ref[...] = ctx.astype(ctx_ref.dtype)
    if return_attn:
        attn_ref[...] = attn.astype(attn_ref.dtype)


def _pick_q_tile(S):
    for cand in (256, 128, 64, 32, 16, 8):
        if S % cand == 0:
            return cand
    return S


def scaled_dot_product_attention(Q, K, V, attn_mask=None, *,
                                 return_attn=True, block_q=128):
    """Pallas implementation of ScaledDotProductAttention.forward (eval mode).

    Returns (context, attn) like the PyTorch module when return_attn=True,
    otherwise just context (skipping the O(S^2) attention HBM writeback).
    """
    B, H, S, d_k = Q.shape
    tq = min(block_q, _pick_q_tile(S))
    grid = (B, H, S // tq)

    has_mask = attn_mask is not None

    in_arrays = [Q, K, V]
    in_specs = [
        pl.BlockSpec((None, None, tq, d_k), lambda b, h, qi: (b, h, qi, 0)),
        pl.BlockSpec((None, None, S, d_k), lambda b, h, qi: (b, h, 0, 0)),
        pl.BlockSpec((None, None, S, d_k), lambda b, h, qi: (b, h, 0, 0)),
    ]

    if has_mask:
        m = attn_mask
        if m.ndim < 4:
            m = m.reshape((1,) * (4 - m.ndim) + m.shape)
        m0, m1, m2, m3 = m.shape
        assert m0 in (1, B) and m1 in (1, H) and m2 in (1, S) and m3 in (1, S), (
            f"attn_mask shape {attn_mask.shape} is not broadcastable to "
            f"{(B, H, S, S)}")
        # Compare against 0 in the ORIGINAL dtype (PyTorch masked_fill
        # semantics: float 0.5 is NOT masked), then pack to int8.
        mask_i8 = (m != 0).astype(jnp.int8)

        def mask_index(b, h, qi, _m0=m0, _m1=m1, _m2=m2):
            return (b if _m0 > 1 else 0,
                    h if _m1 > 1 else 0,
                    qi if _m2 > 1 else 0,
                    0)

        mask_block = (None, None, tq if m2 > 1 else 1, m3)
        in_arrays.append(mask_i8)
        in_specs.append(pl.BlockSpec(mask_block, mask_index))

    out_shapes = [jax.ShapeDtypeStruct((B, H, S, d_k), Q.dtype)]
    out_specs = [
        pl.BlockSpec((None, None, tq, d_k), lambda b, h, qi: (b, h, qi, 0)),
    ]
    if return_attn:
        # attn is emitted in the input dtype (bf16 stays bf16), not f32.
        out_shapes.append(jax.ShapeDtypeStruct((B, H, S, S), Q.dtype))
        out_specs.append(
            pl.BlockSpec((None, None, tq, S), lambda b, h, qi: (b, h, qi, 0)))

    kernel = functools.partial(
        _sdpa_kernel,
        scale=1.0 / math.sqrt(d_k),
        has_mask=has_mask,
        return_attn=return_attn,
    )

    results = pl.pallas_call(
        kernel,
        out_shape=tuple(out_shapes),
        grid_spec=pltpu.PrefetchScalarGridSpec(
            num_scalar_prefetch=0,
            grid=grid,
            in_specs=in_specs,
            out_specs=tuple(out_specs),
        ),
        compiler_params=pltpu.CompilerParams(
            # No reduction axis: every grid point is independent, so all axes
            # may be sharded across v7x's two TensorCores.
            dimension_semantics=("parallel", "parallel", "parallel"),
        ),
    )(*in_arrays)

    if return_attn:
        ctx, attn = results
        return ctx, attn
    if isinstance(results, (tuple, list)):
        (ctx,) = results
        return ctx
    return results


def _reference(Q, K, V, attn_mask, d_k):
    scores = jnp.einsum("bhqd,bhkd->bhqk", Q, K) / math.sqrt(d_k)
    if attn_mask is not None:
        scores = jnp.where(attn_mask == 0, -1.0e9, scores)
    attn = jax.nn.softmax(scores, axis=-1)
    ctx = jnp.einsum("bhqk,bhkd->bhqd", attn, V)
    return ctx, attn


if __name__ == "__main__":
    B, H, S, d_k = 2, 2, 8, 32
    key = jax.random.PRNGKey(0)
    kq, kk, kv = jax.random.split(key, 3)
    Q = jax.random.normal(kq, (B, H, S, d_k), dtype=jnp.float32)
    K = jax.random.normal(kk, (B, H, S, d_k), dtype=jnp.float32)
    V = jax.random.normal(kv, (B, H, S, d_k), dtype=jnp.float32)

    # Broadcastable causal mask (1 = keep, 0 = masked) kept at (1, 1, S, S) so
    # the kernel reuses one small block instead of a dense (B, H, S, S) copy.
    causal = jnp.tril(jnp.ones((S, S), dtype=jnp.float32))
    attn_mask = causal[None, None]                # (1, 1, S, S)

    # Path 1: masked, with attention output (matches the PyTorch module).
    ctx, attn = scaled_dot_product_attention(Q, K, V, attn_mask)
    # Path 2: masked, context only (drops the O(S^2) attn writeback).
    ctx_only = scaled_dot_product_attention(Q, K, V, attn_mask, return_attn=False)
    # Path 3: no mask.
    ctx_nm, attn_nm = scaled_dot_product_attention(Q, K, V, None)
    jax.block_until_ready((ctx, attn, ctx_only, ctx_nm, attn_nm))

    ref_ctx, ref_attn = _reference(Q, K, V, attn_mask, d_k)
    ref_ctx_nm, ref_attn_nm = _reference(Q, K, V, None, d_k)

    # Tolerance covers the EUP approximate-reciprocal softmax denominator.
    tol = dict(atol=2e-3, rtol=2e-3)
    assert jnp.allclose(ctx, ref_ctx, **tol)
    assert jnp.allclose(attn, ref_attn, **tol)
    assert jnp.allclose(ctx_only, ref_ctx, **tol)
    assert jnp.allclose(ctx_nm, ref_ctx_nm, **tol)
    assert jnp.allclose(attn_nm, ref_attn_nm, **tol)

    print("KERNEL_OK")
</pallas_src>

<mosaic_0001>
module attributes {stable_mosaic.version = 11 : i64} {
  func.func @_sdpa_kernel(%arg0: i32, %arg1: i32, %arg2: i32, %arg3: memref<1x1x8x32xf32, #tpu.memory_space<vmem>>, %arg4: memref<1x1x8x32xf32, #tpu.memory_space<vmem>>, %arg5: memref<1x1x8x32xf32, #tpu.memory_space<vmem>>, %arg6: memref<1x1x8x8xi8, #tpu.memory_space<vmem>>, %arg7: memref<1x1x8x32xf32, #tpu.memory_space<vmem>>, %arg8: memref<1x1x8x8xf32, #tpu.memory_space<vmem>>) attributes {dimension_semantics = [#tpu.dimension_semantics<parallel>, #tpu.dimension_semantics<parallel>, #tpu.dimension_semantics<parallel>], iteration_bounds = array<i64: 2, 2, 1>, scalar_prefetch = 0 : i64, scratch_operands = 0 : i64, tpu.core_type = #tpu.core_type<tc>, window_params = [{transform_indices = @transform_0, window_bounds = array<i64: 1, 1, 8, 32>}, {transform_indices = @transform_1, window_bounds = array<i64: 1, 1, 8, 32>}, {transform_indices = @transform_2, window_bounds = array<i64: 1, 1, 8, 32>}, {transform_indices = @transform_3, window_bounds = array<i64: 1, 1, 8, 8>}, {transform_indices = @transform_4, window_bounds = array<i64: 1, 1, 8, 32>}, {transform_indices = @transform_5, window_bounds = array<i64: 1, 1, 8, 8>}]} {
    %c0 = arith.constant 0 : index
    %c0_0 = arith.constant 0 : index
    %c0_1 = arith.constant 0 : index
    %c0_2 = arith.constant 0 : index
    %0 = vector.load %arg3[%c0, %c0_0, %c0_1, %c0_2] : memref<1x1x8x32xf32, #tpu.memory_space<vmem>>, vector<1x1x8x32xf32>
    %1 = vector.shape_cast %0 : vector<1x1x8x32xf32> to vector<8x32xf32>
    %cst = arith.constant 0.176776692 : f32
    %2 = vector.broadcast %cst : f32 to vector<8x32xf32>
    %3 = arith.mulf %1, %2 : vector<8x32xf32>
    %c0_3 = arith.constant 0 : index
    %c0_4 = arith.constant 0 : index
    %c0_5 = arith.constant 0 : index
    %c0_6 = arith.constant 0 : index
    %4 = vector.load %arg4[%c0_3, %c0_4, %c0_5, %c0_6] : memref<1x1x8x32xf32, #tpu.memory_space<vmem>>, vector<1x1x8x32xf32>
    %5 = vector.shape_cast %4 : vector<1x1x8x32xf32> to vector<8x32xf32>
    %cst_7 = arith.constant dense<0.000000e+00> : vector<8x8xf32>
    %6 = tpu.matmul %3, %5, %cst_7 {dimension_numbers = #tpu.dot_dimension_numbers<[1], [1], [0], [0], [0, 0, 1, 0], [], []>} : vector<8x32xf32>, vector<8x32xf32>, vector<8x8xf32> -> vector<8x8xf32>
    %c0_8 = arith.constant 0 : index
    %c0_9 = arith.constant 0 : index
    %c0_10 = arith.constant 0 : index
    %c0_11 = arith.constant 0 : index
    %7 = vector.load %arg6[%c0_8, %c0_9, %c0_10, %c0_11] : memref<1x1x8x8xi8, #tpu.memory_space<vmem>>, vector<1x1x8x8xi8>
    %8 = vector.shape_cast %7 : vector<1x1x8x8xi8> to vector<8x8xi8>
    %c0_i8 = arith.constant 0 : i8
    %9 = vector.broadcast %c0_i8 : i8 to vector<8x8xi8>
    %10 = arith.cmpi ne, %8, %9 : vector<8x8xi8>
    %cst_12 = arith.constant -1.000000e+09 : f32
    %11 = vector.broadcast %cst_12 : f32 to vector<8x8xf32>
    %12 = arith.select %10, %6, %11 : vector<8x8xi1>, vector<8x8xf32>
    %cst_13 = arith.constant dense<0xFF800000> : vector<8xf32>
    %13 = vector.multi_reduction <maximumf>, %12, %cst_13 [1] : vector<8x8xf32> to vector<8xf32>
    %14 = vector.shape_cast %13 : vector<8xf32> to vector<8x1xf32>
    %15 = vector.broadcast %14 : vector<8x1xf32> to vector<8x8xf32>
    %16 = arith.subf %12, %15 : vector<8x8xf32>
    %17 = math.exp %16 : vector<8x8xf32>
    %cst_14 = arith.constant dense<0.000000e+00> : vector<8xf32>
    %18 = vector.multi_reduction <add>, %17, %cst_14 [1] : vector<8x8xf32> to vector<8xf32>
    %19 = vector.shape_cast %18 : vector<8xf32> to vector<8x1xf32>
    %20 = tpu.reciprocal %19 {approx = true} : vector<8x1xf32> -> vector<8x1xf32>
    %21 = vector.broadcast %20 : vector<8x1xf32> to vector<8x8xf32>
    %22 = arith.mulf %17, %21 : vector<8x8xf32>
    %c0_15 = arith.constant 0 : index
    %c0_16 = arith.constant 0 : index
    %c0_17 = arith.constant 0 : index
    %c0_18 = arith.constant 0 : index
    %23 = vector.load %arg5[%c0_15, %c0_16, %c0_17, %c0_18] : memref<1x1x8x32xf32, #tpu.memory_space<vmem>>, vector<1x1x8x32xf32>
    %24 = vector.shape_cast %23 : vector<1x1x8x32xf32> to vector<8x32xf32>
    %cst_19 = arith.constant dense<0.000000e+00> : vector<8x32xf32>
    %25 = tpu.matmul %22, %24, %cst_19 {dimension_numbers = #tpu.dot_dimension_numbers<[1], [0], [0], [1], [0, 0, 1, 1], [], []>} : vector<8x8xf32>, vector<8x32xf32>, vector<8x32xf32> -> vector<8x32xf32>
    %c0_20 = arith.constant 0 : index
    %c0_21 = arith.constant 0 : index
    %c0_22 = arith.constant 0 : index
    %c0_23 = arith.constant 0 : index
    %26 = vector.load %arg7[%c0_20, %c0_21, %c0_22, %c0_23] : memref<1x1x8x32xf32, #tpu.memory_space<vmem>>, vector<1x1x8x32xf32>
    %27 = vector.shape_cast %26 : vector<1x1x8x32xf32> to vector<8x32xf32>
    %28 = vector.shape_cast %25 : vector<8x32xf32> to vector<1x1x8x32xf32>
    tpu.vector_store %arg7[%c0_20, %c0_21, %c0_22, %c0_23], %28 {strides = array<i32>} : memref<1x1x8x32xf32, #tpu.memory_space<vmem>>, vector<1x1x8x32xf32>,
    %c0_24 = arith.constant 0 : index
    %c0_25 = arith.constant 0 : index
    %c0_26 = arith.constant 0 : index
    %c0_27 = arith.constant 0 : index
    %29 = vector.load %arg8[%c0_24, %c0_25, %c0_26, %c0_27] : memref<1x1x8x8xf32, #tpu.memory_space<vmem>>, vector<1x1x8x8xf32>
    %30 = vector.shape_cast %29 : vector<1x1x8x8xf32> to vector<8x8xf32>
    %31 = vector.shape_cast %22 : vector<8x8xf32> to vector<1x1x8x8xf32>
    tpu.vector_store %arg8[%c0_24, %c0_25, %c0_26, %c0_27], %31 {strides = array<i32>} : memref<1x1x8x8xf32, #tpu.memory_space<vmem>>, vector<1x1x8x8xf32>,
    return
  }
  func.func @transform_0(%arg0: i32, %arg1: i32, %arg2: i32) -> (i32, i32, i32, i32) {
    %c0_i32 = arith.constant 0 : i32
    %c0_i32_0 = arith.constant 0 : i32
    return %arg0, %arg1, %arg2, %c0_i32 : i32, i32, i32, i32
  }
  func.func @transform_1(%arg0: i32, %arg1: i32, %arg2: i32) -> (i32, i32, i32, i32) {
    %c0_i32 = arith.constant 0 : i32
    %c0_i32_0 = arith.constant 0 : i32
    %c0_i32_1 = arith.constant 0 : i32
    return %arg0, %arg1, %c0_i32, %c0_i32_0 : i32, i32, i32, i32
  }
  func.func @transform_2(%arg0: i32, %arg1: i32, %arg2: i32) -> (i32, i32, i32, i32) {
    %c0_i32 = arith.constant 0 : i32
    %c0_i32_0 = arith.constant 0 : i32
    %c0_i32_1 = arith.constant 0 : i32
    return %arg0, %arg1, %c0_i32, %c0_i32_0 : i32, i32, i32, i32
  }
  func.func @transform_3(%arg0: i32, %arg1: i32, %arg2: i32) -> (i32, i32, i32, i32) {
    %c0_i32 = arith.constant 0 : i32
    %c0_i32_0 = arith.constant 0 : i32
    %c0_i32_1 = arith.constant 0 : i32
    %c0_i32_2 = arith.constant 0 : i32
    return %c0_i32, %c0_i32_0, %arg2, %c0_i32_1 : i32, i32, i32, i32
  }
  func.func @transform_4(%arg0: i32, %arg1: i32, %arg2: i32) -> (i32, i32, i32, i32) {
    %c0_i32 = arith.constant 0 : i32
    %c0_i32_0 = arith.constant 0 : i32
    return %arg0, %arg1, %arg2, %c0_i32 : i32, i32, i32, i32
  }
  func.func @transform_5(%arg0: i32, %arg1: i32, %arg2: i32) -> (i32, i32, i32, i32) {
    %c0_i32 = arith.constant 0 : i32
    %c0_i32_0 = arith.constant 0 : i32
    return %arg0, %arg1, %arg2, %c0_i32 : i32, i32, i32, i32
  }
}

</mosaic_0001>

<llo_original>
// kernel: tpu_custom_call.1
$region0: #{tpu_custom_call.1}
  #allocation0 [shape = 'u32[]', space=smem, size = 0x4, offset = 0x4, fixed_abs, tag = 'smem constant byte address 0x4 - core index']
  #allocation1 [shape = 'u32[144,128]{1,0:T(1,128)}', space=vmem, size = 0x12000, scoped, tag = 'internal scratch']
  %s0 = inlined_call_operand.hbm [shape: f32[2,2,8,32], index: 0, kind: input, shape index: {}]
  %s1 = inlined_call_operand.hbm [shape: f32[2,2,8,32], index: 1, kind: input, shape index: {}]
  %s2 = inlined_call_operand.hbm [shape: f32[2,2,8,32], index: 2, kind: input, shape index: {}]
  %s3 = inlined_call_operand.vmem [shape: s8[1,1,8,8], index: 3, kind: input, shape index: {}]
  %s4 = inlined_call_operand.hbm [shape: f32[2,2,8,32], index: 4, kind: output, shape index: {0}]
  %s5 = inlined_call_operand.hbm [shape: f32[2,2,8,8], index: 5, kind: output, shape index: {1}]
  %6 = xla_tuple %s4, %s5
  %s7 = sld [smem:[#allocation0]]
  $region69: #{tpu_custom_call.1} parent=0
    _
  %s9 = ssub.s32 1, %s7
  %s10 = scalar_select 0, %s9, %s7
  $region1: #{tpu_custom_call.1} parent=0
    #allocation2 [shape = 'u8[8192]{0}', space=vmem, size = 0x2000, scoped, tag = 'input window, operand 0']
    #allocation3 [shape = 's32[2]{0}', space=sflag, size = 0x8, scoped, tag = 'scoped memory for tpu_custom_call.1']
    #allocation4 [shape = 's32[2]{0}', space=sflag, size = 0x8, scoped, tag = 'scoped memory for tpu_custom_call.1']
    #allocation5 [shape = 'u8[8192]{0}', space=vmem, size = 0x2000, scoped, tag = 'input window, operand 1']
    #allocation6 [shape = 's32[2]{0}', space=sflag, size = 0x8, scoped, tag = 'scoped memory for tpu_custom_call.1']
    #allocation7 [shape = 'u8[8192]{0}', space=vmem, size = 0x2000, scoped, tag = 'input window, operand 2']
    #allocation8 [shape = 'u8[8192]{0}', space=vmem, size = 0x2000, scoped, tag = 'output window, operand 0']
    #allocation9 [shape = 'u8[8192]{0}', space=vmem, size = 0x2000, scoped, tag = 'output window, operand 1']
    #allocation10 [shape = 's32[2]{0}', space=sflag, size = 0x8, scoped, tag = 'scoped memory for tpu_custom_call.1']
    %11 = vsyncpa [#allocation3], 0
    %s12 = scalar_lea.sflag [#allocation3], 1
    %13 = vsyncpa %s12, 0
    %14 = vsyncpa [#allocation6], 0
    %s15 = scalar_lea.sflag [#allocation6], 1
    %16 = vsyncpa %s15, 0
    %17 = vsyncpa [#allocation4], 0
    %s18 = scalar_lea.sflag [#allocation4], 1
    %19 = vsyncpa %s18, 0
    %20 = vsyncpa [#allocation10], 0
    %s21 = scalar_lea.sflag [#allocation10], 1
    %22 = vsyncpa %s21, 0
    loop: start=0, step=1, limit=6
    $region2: #{tpu_custom_call.1} parent=1 // loop_pre_header
      _
    $region3: #{tpu_custom_call.1} parent=1 // loop_header
      %s24 = sphi 0, %s28
      %p25 = scmp.ge.s32.totalorder %s24, 6
      %s31 = sphi 0, %s50
      %s32 = sphi 0, %s46
      %s33 = sphi 0, %s42
      %s34 = sphi 0, %s31
      %s35 = sphi 0, %s32
      %s36 = sphi 0, %s33
      %s37 = sphi 0, %s34
      %s38 = sphi 0, %s35
      %s39 = sphi 0, %s36
      %s57 = sphi 0, %s59
      %s60 = sphi 0, %s57
      %s61 = sphi 0, %s60
      %s77 = sphi 0, %s61
      %s85 = sphi 0, %s87
      %s88 = sphi 0, %s85
      %s89 = sphi 0, %s88
      %s105 = sphi 0, %s89
      %s113 = sphi 0, %s115
      %s116 = sphi 0, %s113
      %s117 = sphi 0, %s116
      %s133 = sphi 0, %s117
      %s139 = sphi 0, %s141
      %s142 = sphi 0, %s139
      %s143 = sphi 0, %s142
      %s159 = sphi 0, %s143
      %s169 = sphi 0, %s171
      %s172 = sphi 0, %s169
      %s173 = sphi 0, %s172
      %s189 = sphi 0, %s173
      %s199 = sphi 0, %s201
      %s202 = sphi 0, %s199
      %s203 = sphi 0, %s202
      %s219 = sphi 0, %s203
    $region4: #{tpu_custom_call.1} parent=1 // loop_header_branch
      %27 = sbr.rel (%p25) target = $region8
    $region5: #{tpu_custom_call.1} parent=1 // loop_body
      %s29 = ssub.s32 %s24, 1
      %s30 = ssub.s32 %s24, 2
      %s40 = sadd.s32 1, %s33
      %p41 = scmp.ge.s32.totalorder %s40, 1
      %s42 = scalar_select %p41, 0, %s40
      %s43 = sadd.s32 1, %s32
      %s44 = scalar_select %p41, %s43, %s32
      %p45 = scmp.ge.s32.totalorder %s44, 2
      %s46 = scalar_select %p45, 0, %s44
      %s47 = sadd.s32 1, %s31
      %s48 = scalar_select %p45, %s47, %s31
      %p49 = scmp.ge.s32.totalorder %s48, 2
      %s50 = scalar_select %p49, 0, %s48
      %s51 = ssub.s32 %s31, %s50
      %s52 = ssub.s32 %s32, %s46
      %s53 = sor.u32 %s51, %s52
      %s54 = ssub.s32 %s33, %s42
      %s55 = sor.u32 %s53, %s54
      %p56 = scmp.eq.s32.totalorder %s55, 0
      %s58 = sadd.s32 %s57, 1
      %s59 = scalar_select %p56, %s57, %s58
      %p62 = pneg %p56
      %p63 = scmp.eq.s32.totalorder %s24, 3
      %p64 = por %p62, %p63
      %p65 = scmp.ne.s32.totalorder %s57, %s60
      %p66 = scmp.eq.s32.totalorder %s24, 0
      %p67 = por %p65, %p66
      %p68 = scmp.ne.s32.totalorder %s57, %s60
      %p69 = scmp.eq.s32.totalorder %s29, 3
      %p70 = por %p68, %p69
      %p71 = scmp.ne.s32.totalorder %s60, %s61
      %p72 = scmp.eq.s32.totalorder %s29, 0
      %p73 = por %p71, %p72
      %p74 = scmp.ne.s32.totalorder %s60, %s61
      %p75 = scmp.eq.s32.totalorder %s30, 3
      %p76 = por %p74, %p75
      %p78 = scmp.ne.s32.totalorder %s61, %s77
      %p79 = scmp.eq.s32.totalorder %s30, 0
      %p80 = por %p78, %p79
      %s81 = ssub.s32 %s31, %s50
      %s82 = ssub.s32 %s32, %s46
      %s83 = sor.u32 %s81, %s82
      %p84 = scmp.eq.s32.totalorder %s83, 0
      %s86 = sadd.s32 %s85, 1
      %s87 = scalar_select %p84, %s85, %s86
      %p90 = pneg %p84
      %p91 = scmp.eq.s32.totalorder %s24, 3
      %p92 = por %p90, %p91
      %p93 = scmp.ne.s32.totalorder %s85, %s88
      %p94 = scmp.eq.s32.totalorder %s24, 0
      %p95 = por %p93, %p94
      %p96 = scmp.ne.s32.totalorder %s85, %s88
      %p97 = scmp.eq.s32.totalorder %s29, 3
      %p98 = por %p96, %p97
      %p99 = scmp.ne.s32.totalorder %s88, %s89
      %p100 = scmp.eq.s32.totalorder %s29, 0
      %p101 = por %p99, %p100
      %p102 = scmp.ne.s32.totalorder %s88, %s89
      %p103 = scmp.eq.s32.totalorder %s30, 3
      %p104 = por %p102, %p103
      %p106 = scmp.ne.s32.totalorder %s89, %s105
      %p107 = scmp.eq.s32.totalorder %s30, 0
      %p108 = por %p106, %p107
      %s109 = ssub.s32 %s31, %s50
      %s110 = ssub.s32 %s32, %s46
      %s111 = sor.u32 %s109, %s110
      %p112 = scmp.eq.s32.totalorder %s111, 0
      %s114 = sadd.s32 %s113, 1
      %s115 = scalar_select %p112, %s113, %s114
      %p118 = pneg %p112
      %p119 = scmp.eq.s32.totalorder %s24, 3
      %p120 = por %p118, %p119
      %p121 = scmp.ne.s32.totalorder %s113, %s116
      %p122 = scmp.eq.s32.totalorder %s24, 0
      %p123 = por %p121, %p122
      %p124 = scmp.ne.s32.totalorder %s113, %s116
      %p125 = scmp.eq.s32.totalorder %s29, 3
      %p126 = por %p124, %p125
      %p127 = scmp.ne.s32.totalorder %s116, %s117
      %p128 = scmp.eq.s32.totalorder %s29, 0
      %p129 = por %p127, %p128
      %p130 = scmp.ne.s32.totalorder %s116, %s117
      %p131 = scmp.eq.s32.totalorder %s30, 3
      %p132 = por %p130, %p131
      %p134 = scmp.ne.s32.totalorder %s117, %s133
      %p135 = scmp.eq.s32.totalorder %s30, 0
      %p136 = por %p134, %p135
      %s137 = ssub.s32 %s33, %s42
      %p138 = scmp.eq.s32.totalorder %s137, 0
      %s140 = sadd.s32 %s139, 1
      %s141 = scalar_select %p138, %s139, %s140
      %p144 = pneg %p138
      %p145 = scmp.eq.s32.totalorder %s24, 3
      %p146 = por %p144, %p145
      %p147 = scmp.ne.s32.totalorder %s139, %s142
      %p148 = scmp.eq.s32.totalorder %s24, 0
      %p149 = por %p147, %p148
      %p150 = scmp.ne.s32.totalorder %s139, %s142
      %p151 = scmp.eq.s32.totalorder %s29, 3
      %p152 = por %p150, %p151
      %p153 = scmp.ne.s32.totalorder %s142, %s143
      %p154 = scmp.eq.s32.totalorder %s29, 0
      %p155 = por %p153, %p154
      %p156 = scmp.ne.s32.totalorder %s142, %s143
      %p157 = scmp.eq.s32.totalorder %s30, 3
      %p158 = por %p156, %p157
      %p160 = scmp.ne.s32.totalorder %s143, %s159
      %p161 = scmp.eq.s32.totalorder %s30, 0
      %p162 = por %p160, %p161
      %s163 = ssub.s32 %s31, %s50
      %s164 = ssub.s32 %s32, %s46
      %s165 = sor.u32 %s163, %s164
      %s166 = ssub.s32 %s33, %s42
      %s167 = sor.u32 %s165, %s166
      %p168 = scmp.eq.s32.totalorder %s167, 0
      %s170 = sadd.s32 %s169, 1
      %s171 = scalar_select %p168, %s169, %s170
      %p174 = pneg %p168
      %p175 = scmp.eq.s32.totalorder %s24, 3
      %p176 = por %p174, %p175
      %p177 = scmp.ne.s32.totalorder %s169, %s172
      %p178 = scmp.eq.s32.totalorder %s24, 0
      %p179 = por %p177, %p178
      %p180 = scmp.ne.s32.totalorder %s169, %s172
      %p181 = scmp.eq.s32.totalorder %s29, 3
      %p182 = por %p180, %p181
      %p183 = scmp.ne.s32.totalorder %s172, %s173
      %p184 = scmp.eq.s32.totalorder %s29, 0
      %p185 = por %p183, %p184
      %p186 = scmp.ne.s32.totalorder %s172, %s173
      %p187 = scmp.eq.s32.totalorder %s30, 3
      %p188 = por %p186, %p187
      %p190 = scmp.ne.s32.totalorder %s173, %s189
      %p191 = scmp.eq.s32.totalorder %s30, 0
      %p192 = por %p190, %p191
      %s193 = ssub.s32 %s31, %s50
      %s194 = ssub.s32 %s32, %s46
      %s195 = sor.u32 %s193, %s194
      %s196 = ssub.s32 %s33, %s42
      %s197 = sor.u32 %s195, %s196
      %p198 = scmp.eq.s32.totalorder %s197, 0
      %s200 = sadd.s32 %s199, 1
      %s201 = scalar_select %p198, %s199, %s200
      %p204 = pneg %p198
      %p205 = scmp.eq.s32.totalorder %s24, 3
      %p206 = por %p204, %p205
      %p207 = scmp.ne.s32.totalorder %s199, %s202
      %p208 = scmp.eq.s32.totalorder %s24, 0
      %p209 = por %p207, %p208
      %p210 = scmp.ne.s32.totalorder %s199, %s202
      %p211 = scmp.eq.s32.totalorder %s29, 3
      %p212 = por %p210, %p211
      %p213 = scmp.ne.s32.totalorder %s202, %s203
      %p214 = scmp.eq.s32.totalorder %s29, 0
      %p215 = por %p213, %p214
      %p216 = scmp.ne.s32.totalorder %s202, %s203
      %p217 = scmp.eq.s32.totalorder %s30, 3
      %p218 = por %p216, %p217
      %p220 = scmp.ne.s32.totalorder %s203, %s219
      %p221 = scmp.eq.s32.totalorder %s30, 0
      %p222 = por %p220, %p221
      %p223 = scmp.le.s32.totalorder 1, %s24
      %p224 = scmp.lt.s32.totalorder %s24, 5
      %p225 = pnand %p223, %p224
      %p226 = pneg %p225
      // Predicated region
      $region9: #{tpu_custom_call.1} parent=5 // pred_check
        _
      $region10: #{tpu_custom_call.1} parent=5 // pred_check_branch
        %228 = sbr.rel (%p225) target = $region12
      $region11: #{tpu_custom_call.1} parent=5 // pred_region
        %s229 = ssub.s32 %s24, 1
        // Predicated region
        $region13: #{tpu_custom_call.1} parent=11 // pred_check
          %p230 = pneg %p155
        $region14: #{tpu_custom_call.1} parent=11 // pred_check_branch
          %232 = sbr.rel (%p230) target = $region16
        $region15: #{tpu_custom_call.1} parent=11 // pred_region
          %p233 = scmp.lt.s32.totalorder %s36, 0
          %s234 = scalar_select %p233, %s36, 0
          %s235 = smul.addr %s234, 2
          %s236 = scalar_lea.vmem %s3, %s235
        $region16: #{tpu_custom_call.1} parent=11 // pred_fallthru
          _
      $region12: #{tpu_custom_call.1} parent=5 // pred_fallthru
        _
      %p237 = scmp.lt.s32.totalorder %s24, 4
      // Predicated region
      $region17: #{tpu_custom_call.1} parent=5 // pred_check
        %p238 = pneg %p237
      $region18: #{tpu_custom_call.1} parent=5 // pred_check_branch
        %240 = sbr.rel (%p238) target = $region20
      $region19: #{tpu_custom_call.1} parent=5 // pred_region
        // Predicated region
        $region21: #{tpu_custom_call.1} parent=19 // pred_check
          %p241 = pneg %p67
        $region22: #{tpu_custom_call.1} parent=19 // pred_check_branch
          %243 = sbr.rel (%p241) target = $region24
        $region23: #{tpu_custom_call.1} parent=19 // pred_region
          %s244 = sand.u32 %s57, 1
          %s245 = scalar_lea.sflag [#allocation3], %s244
          %s246 = sand.u32 %s57, 1
          %s247 = smul.addr %s246, 8
          %s248 = scalar_lea.vmem [#allocation2], %s247
          %s250 = ssub.s32 128, 128
          %251 = vsyncadd %s245, %s250
          %s252 = sadd.s32 %s33, %s32
          %s253 = smul.addr %s31, 2
          %s254 = sadd.s32 %s252, %s253
          %s255 = smul.addr %s254, 128
          %s256 = scalar_lea.hbm %s0, %s255
          %s258 = sshll.u32 %s248, 4
          %s259 = int_to_ptr.vmem [resolvable:$true] %s258
          %261 = dma.hbm_to_vmem [thread:$0]  %s256, 128, %s259, %s245
        $region24: #{tpu_custom_call.1} parent=19 // pred_fallthru
          _
        // Predicated region
        $region25: #{tpu_custom_call.1} parent=19 // pred_check
          %p262 = pneg %p95
        $region26: #{tpu_custom_call.1} parent=19 // pred_check_branch
          %264 = sbr.rel (%p262) target = $region28
        $region27: #{tpu_custom_call.1} parent=19 // pred_region
          %s265 = sand.u32 %s24, 1
          %s266 = scalar_lea.sflag [#allocation6], %s265
          %s267 = sand.u32 %s85, 1
          %s268 = smul.addr %s267, 8
          %s269 = scalar_lea.vmem [#allocation5], %s268
          %s271 = ssub.s32 128, 128
          %272 = vsyncadd %s266, %s271
          %s273 = smul.addr %s31, 2
          %s274 = sadd.s32 %s32, %s273
          %s275 = smul.addr %s274, 128
          %s276 = scalar_lea.hbm %s1, %s275
          %s278 = sshll.u32 %s269, 4
          %s279 = int_to_ptr.vmem [resolvable:$true] %s278
          %281 = dma.hbm_to_vmem [thread:$0]  %s276, 128, %s279, %s266
        $region28: #{tpu_custom_call.1} parent=19 // pred_fallthru
          _
        // Predicated region
        $region29: #{tpu_custom_call.1} parent=19 // pred_check
          %p282 = pneg %p123
        $region30: #{tpu_custom_call.1} parent=19 // pred_check_branch
          %284 = sbr.rel (%p282) target = $region32
        $region31: #{tpu_custom_call.1} parent=19 // pred_region
          %s285 = sand.u32 %s24, 1
          %s286 = scalar_lea.sflag [#allocation6], %s285
          %s287 = sand.u32 %s113, 1
          %s288 = smul.addr %s287, 8
          %s289 = scalar_lea.vmem [#allocation7], %s288
          %s291 = ssub.s32 128, 128
          %292 = vsyncadd %s286, %s291
          %s293 = smul.addr %s31, 2
          %s294 = sadd.s32 %s32, %s293
          %s295 = smul.addr %s294, 128
          %s296 = scalar_lea.hbm %s2, %s295
          %s298 = sshll.u32 %s289, 4
          %s299 = int_to_ptr.vmem [resolvable:$true] %s298
          %301 = dma.hbm_to_vmem [thread:$0]  %s296, 128, %s299, %s286
        $region32: #{tpu_custom_call.1} parent=19 // pred_fallthru
          _
      $region20: #{tpu_custom_call.1} parent=5 // pred_fallthru
        _
      %p302 = scmp.le.s32.totalorder 1, %s24
      %p303 = scmp.lt.s32.totalorder %s24, 5
      %p304 = pnand %p302, %p303
      %p305 = pneg %p304
      // Predicated region
      $region33: #{tpu_custom_call.1} parent=5 // pred_check
        _
      $region34: #{tpu_custom_call.1} parent=5 // pred_check_branch
        %307 = sbr.rel (%p304) target = $region36
      $region35: #{tpu_custom_call.1} parent=5 // pred_region
        %s308 = ssub.s32 %s24, 1
        %s309 = sand.u32 %s60, 1
        %s310 = scalar_lea.sflag [#allocation3], %s309
        %s311 = sand.u32 %s60, 1
        %s312 = smul.addr %s311, 8
        %s313 = scalar_lea.vmem [#allocation2], %s312
        // Predicated region
        $region37: #{tpu_custom_call.1} parent=35 // pred_check
          %p314 = pneg %p73
        $region38: #{tpu_custom_call.1} parent=35 // pred_check_branch
          %316 = sbr.rel (%p314) target = $region40
        $region39: #{tpu_custom_call.1} parent=35 // pred_region
          %317 = dma.done %s310, 128
        $region40: #{tpu_custom_call.1} parent=35 // pred_fallthru
          _
        %s318 = sand.u32 %s29, 1
        %s319 = scalar_lea.sflag [#allocation6], %s318
        %s320 = sand.u32 %s88, 1
        %s321 = smul.addr %s320, 8
        %s322 = scalar_lea.vmem [#allocation5], %s321
        // Predicated region
        $region41: #{tpu_custom_call.1} parent=35 // pred_check
          %p323 = pneg %p101
        $region42: #{tpu_custom_call.1} parent=35 // pred_check_branch
          %325 = sbr.rel (%p323) target = $region44
        $region43: #{tpu_custom_call.1} parent=35 // pred_region
          %326 = dma.done %s319, 128
        $region44: #{tpu_custom_call.1} parent=35 // pred_fallthru
          _
        %s327 = sand.u32 %s29, 1
        %s328 = scalar_lea.sflag [#allocation6], %s327
        %s329 = sand.u32 %s116, 1
        %s330 = smul.addr %s329, 8
        %s331 = scalar_lea.vmem [#allocation7], %s330
        // Predicated region
        $region45: #{tpu_custom_call.1} parent=35 // pred_check
          %p332 = pneg %p129
        $region46: #{tpu_custom_call.1} parent=35 // pred_check_branch
          %334 = sbr.rel (%p332) target = $region48
        $region47: #{tpu_custom_call.1} parent=35 // pred_region
          %335 = dma.done %s328, 128
        $region48: #{tpu_custom_call.1} parent=35 // pred_fallthru
          _
        %s336 = sand.u32 %s60, 1
        %s337 = scalar_lea.sflag [#allocation3], %s336
        %s338 = sand.u32 %s60, 1
        %s339 = smul.addr %s338, 8
        %s340 = scalar_lea.vmem [#allocation2], %s339
        %p341 = pneg %p73
        %p342 = pneg %p70
        %s343 = sand.u32 %s29, 1
        %s344 = scalar_lea.sflag [#allocation6], %s343
        %s345 = sand.u32 %s88, 1
        %s346 = smul.addr %s345, 8
        %s347 = scalar_lea.vmem [#allocation5], %s346
        %p348 = pneg %p101
        %p349 = pneg %p98
        %s350 = sand.u32 %s29, 1
        %s351 = scalar_lea.sflag [#allocation6], %s350
        %s352 = sand.u32 %s116, 1
        %s353 = smul.addr %s352, 8
        %s354 = scalar_lea.vmem [#allocation7], %s353
        %p355 = pneg %p129
        %p356 = pneg %p126
        %p357 = scmp.lt.s32.totalorder %s36, 0
        %s358 = scalar_select %p357, %s36, 0
        %s359 = smul.addr %s358, 2
        %s360 = scalar_lea.vmem %s3, %s359
        %p361 = pneg %p155
        %p362 = pneg %p152
        %p363 = pneg %p185
        %p364 = pneg %p182
        %s365 = sand.u32 %s172, 1
        %s366 = scalar_lea.sflag [#allocation4], %s365
        %s367 = sand.u32 %s172, 1
        %s368 = smul.addr %s367, 8
        %s369 = scalar_lea.vmem [#allocation8], %s368
        %p370 = pneg %p215
        %p371 = pneg %p212
        %s372 = sand.u32 %s202, 1
        %s373 = scalar_lea.sflag [#allocation10], %s372
        %s374 = sand.u32 %s202, 1
        %s375 = smul.addr %s374, 8
        %s376 = scalar_lea.vmem [#allocation9], %s375
        %p377 = scmp.lt.s32.totalorder %s36, 0
        %s378 = scalar_select %p377, %s36, 0
        %s379 = smul.addr %s378, 2
        %s380 = scalar_lea.vmem %s3, %s379
        %v383 = vld [vmem:[%s313] sm:$0xff]
        %v384 = vmul.f32 %v383, 0.17677669
        %v385 = vld [vmem:[%s322] sm:$0xff]
        %vm386 = vcmask 261120
        %v388 = vsel %vm386, %v384, 0
        %v391 = vsel %vm386, %v385, 0
        %393 = vmatprep.subr.mxu0 0.0
        %394 = vmatpush1.xpose.msra.mxu0 0.0
        %395 = vmatprep.subr.mxu0 0.0
        %396 = vmatpush1.xpose.msra.mxu0 0.0
        %397 = vmatprep.subr.mxu0 0.0
        %398 = vmatpush1.xpose.msra.mxu0 0.0
        %399 = vmatprep.subr.mxu0 0.0
        %400 = vmatpush1.xpose.msra.mxu0 0.0
        %401 = vmatprep.subr.mxu0 0.0
        %402 = vmatpush1.xpose.msra.mxu0 0.0
        %403 = vmatprep.subr.mxu0 0.0
        %404 = vmatpush1.xpose.msra.mxu0 0.0
        %405 = vmatprep.subr.mxu0 0.0
        %406 = vmatpush1.xpose.msra.mxu0 0.0
        %407 = vmatprep.subr.mxu0 0.0
        %408 = vmatpush1.xpose.msra.mxu0 0.0
        %409 = vmatprep.subr.mxu0 0.0
        %410 = vmatpush1.xpose.msra.mxu0 0.0
        %411 = vmatprep.subr.mxu0 0.0
        %412 = vmatpush1.xpose.msra.mxu0 0.0
        %413 = vmatprep.subr.mxu0 0.0
        %414 = vmatpush1.xpose.msra.mxu0 0.0
        %415 = vmatprep.subr.mxu0 0.0
        %416 = vmatpush1.xpose.msra.mxu0 0.0
        %417 = vmatprep.subr.mxu0 0.0
        %418 = vmatpush1.xpose.msra.mxu0 0.0
        %419 = vmatprep.subr.mxu0 0.0
        %420 = vmatpush1.xpose.msra.mxu0 0.0
        %421 = vmatprep.subr.mxu0 0.0
        %422 = vmatpush1.xpose.msra.mxu0 0.0
        %423 = vmatprep.subr.mxu0 0.0
        %424 = vmatpush1.xpose.msra.mxu0 %v391
        %425 = vmatprep.subr.mxu0 0.0
        %426 = vmatpush2.xpose.msra.mxu0 0.0
        %427 = vmatprep.subr.mxu0 0.0
        %428 = vmatpush2.xpose.msra.mxu0 0.0
        %429 = vmatprep.subr.mxu0 0.0
        %430 = vmatpush2.xpose.msra.mxu0 0.0
        %431 = vmatprep.subr.mxu0 0.0
        %432 = vmatpush2.xpose.msra.mxu0 0.0
        %433 = vmatprep.subr.mxu0 0.0
        %434 = vmatpush2.xpose.msra.mxu0 0.0
        %435 = vmatprep.subr.mxu0 0.0
        %436 = vmatpush2.xpose.msra.mxu0 0.0
        %437 = vmatprep.subr.mxu0 0.0
        %438 = vmatpush2.xpose.msra.mxu0 0.0
        %439 = vmatprep.subr.mxu0 0.0
        %440 = vmatpush2.xpose.msra.mxu0 0.0
        %441 = vmatprep.subr.mxu0 0.0
        %442 = vmatpush2.xpose.msra.mxu0 0.0
        %443 = vmatprep.subr.mxu0 0.0
        %444 = vmatpush2.xpose.msra.mxu0 0.0
        %445 = vmatprep.subr.mxu0 0.0
        %446 = vmatpush2.xpose.msra.mxu0 0.0
        %447 = vmatprep.subr.mxu0 0.0
        %448 = vmatpush2.xpose.msra.mxu0 0.0
        %449 = vmatprep.subr.mxu0 0.0
        %450 = vmatpush2.xpose.msra.mxu0 0.0
        %451 = vmatprep.subr.mxu0 0.0
        %452 = vmatpush2.xpose.msra.mxu0 0.0
        %453 = vmatprep.subr.mxu0 0.0
        %454 = vmatpush2.xpose.msra.mxu0 0.0
        %455 = vmatprep.subr.mxu0 0.0
        %456 = vmatpush2.xpose.msra.mxu0 0.0
        %457 = vmatprep.mubr.f32.mxu0 0.0
        %458 = vmatmul.mubr.f32.gmra.mxu0 %v388
        %v459 = vpop.f32.mrf.mxu0
        %v460 = vadd.f32 0.0, %v459
        %v461 = vpop.f32.mrf.mxu0
        %462 = vdwg.mxu0
        %v463 = vld [vmem:[%s380] sm:$0x3]
        %vm464 = vnez %v463
        %v465 = vsel %vm464, 16843009, 0
        %v466 = vunpack.c.0.s8 %v465
        %vm467 = vcmp.ne.s32.totalorder %v466, 0
        %v468 = vsel %vm467, %v460, -1e+09
        %vm469 = vcmask 64512
        %v470 = vsel %vm469, %v468, -inf
        %471 = vmax.xlane.f32.xlu0 %v470
        %v472 = vpop.xlane.xlu0 %471
        %v473 = vsub.f32 %v468, %v472
        %v474 = vmul.f32 %v473, 1.442695
        %v475 = vpow.pop %v474
        %v476 = vsel %vm469, %v475, 0.0
        %477 = vadd.xlane.f32.xlu0 %v476
        %v478 = vpop.xlane.xlu0 %477
        %v479 = vrcp.pop %v478
        %v480 = vmul.f32 %v475, %v479
        %v481 = vld [vmem:[%s331] sm:$0xff]
        %v483 = vsel %vm469, %v480, 0
        %485 = vmatprep.subr.mxu0 0.0
        %486 = vmatpush1.msra.mxu0 0.0
        %487 = vmatprep.subr.mxu0 0.0
        %488 = vmatpush1.msra.mxu0 0.0
        %489 = vmatprep.subr.mxu0 0.0
        %490 = vmatpush1.msra.mxu0 0.0
        %491 = vmatprep.subr.mxu0 0.0
        %492 = vmatpush1.msra.mxu0 0.0
        %493 = vmatprep.subr.mxu0 0.0
        %494 = vmatpush1.msra.mxu0 0.0
        %495 = vmatprep.subr.mxu0 0.0
        %496 = vmatpush1.msra.mxu0 0.0
        %497 = vmatprep.subr.mxu0 0.0
        %498 = vmatpush1.msra.mxu0 0.0
        %499 = vmatprep.subr.mxu0 0.0
        %500 = vmatpush1.msra.mxu0 0.0
        %501 = vmatprep.subr.mxu0 0.0
        %502 = vmatpush1.msra.mxu0 0.0
        %503 = vmatprep.subr.mxu0 0.0
        %504 = vmatpush1.msra.mxu0 0.0
        %505 = vmatprep.subr.mxu0 0.0
        %506 = vmatpush1.msra.mxu0 0.0
        %507 = vmatprep.subr.mxu0 0.0
        %508 = vmatpush1.msra.mxu0 0.0
        %509 = vmatprep.subr.mxu0 0.0
        %510 = vmatpush1.msra.mxu0 0.0
        %511 = vmatprep.subr.mxu0 0.0
        %512 = vmatpush1.msra.mxu0 0.0
        %513 = vmatprep.subr.mxu0 0.0
        %514 = vmatpush1.msra.mxu0 0.0
        %515 = vmatprep.subr.mxu0 0.0
        %516 = vmatpush1.msra.mxu0 %v481
        %517 = vmatprep.subr.mxu0 0.0
        %518 = vmatpush2.msra.mxu0 0.0
        %519 = vmatprep.subr.mxu0 0.0
        %520 = vmatpush2.msra.mxu0 0.0
        %521 = vmatprep.subr.mxu0 0.0
        %522 = vmatpush2.msra.mxu0 0.0
        %523 = vmatprep.subr.mxu0 0.0
        %524 = vmatpush2.msra.mxu0 0.0
        %525 = vmatprep.subr.mxu0 0.0
        %526 = vmatpush2.msra.mxu0 0.0
        %527 = vmatprep.subr.mxu0 0.0
        %528 = vmatpush2.msra.mxu0 0.0
        %529 = vmatprep.subr.mxu0 0.0
        %530 = vmatpush2.msra.mxu0 0.0
        %531 = vmatprep.subr.mxu0 0.0
        %532 = vmatpush2.msra.mxu0 0.0
        %533 = vmatprep.subr.mxu0 0.0
        %534 = vmatpush2.msra.mxu0 0.0
        %535 = vmatprep.subr.mxu0 0.0
        %536 = vmatpush2.msra.mxu0 0.0
        %537 = vmatprep.subr.mxu0 0.0
        %538 = vmatpush2.msra.mxu0 0.0
        %539 = vmatprep.subr.mxu0 0.0
        %540 = vmatpush2.msra.mxu0 0.0
        %541 = vmatprep.subr.mxu0 0.0
        %542 = vmatpush2.msra.mxu0 0.0
        %543 = vmatprep.subr.mxu0 0.0
        %544 = vmatpush2.msra.mxu0 0.0
        %545 = vmatprep.subr.mxu0 0.0
        %546 = vmatpush2.msra.mxu0 0.0
        %547 = vmatprep.subr.mxu0 0.0
        %548 = vmatpush2.msra.mxu0 0.0
        %549 = vmatprep.mubr.f32.mxu0 0.0
        %550 = vmatmul.mubr.f32.gmra.mxu0 %v483
        %v551 = vpop.f32.mrf.mxu0
        %v552 = vadd.f32 0.0, %v551
        %v553 = vpop.f32.mrf.mxu0
        %554 = vdwg.mxu0
        %555 = vst.msk [vmem:[%s369] sm:$0xff] %vm386, %v552
        %556 = vst.msk [vmem:[%s376] sm:$0xff] %vm469, %v480
        %s557 = sand.u32 %s172, 1
        %s558 = scalar_lea.sflag [#allocation4], %s557
        %s559 = sand.u32 %s172, 1
        %s560 = smul.addr %s559, 8
        %s561 = scalar_lea.vmem [#allocation8], %s560
        %s562 = sand.u32 %s202, 1
        %s563 = scalar_lea.sflag [#allocation10], %s562
        %s564 = sand.u32 %s202, 1
        %s565 = smul.addr %s564, 8
        %s566 = scalar_lea.vmem [#allocation9], %s565
        // Predicated region
        $region49: #{tpu_custom_call.1} parent=35 // pred_check
          %p567 = pneg %p182
        $region50: #{tpu_custom_call.1} parent=35 // pred_check_branch
          %569 = sbr.rel (%p567) target = $region52
        $region51: #{tpu_custom_call.1} parent=35 // pred_region
          %s571 = ssub.s32 128, 128
          %572 = vsyncadd %s558, %s571
          %s573 = sadd.s32 %s36, %s35
          %s574 = smul.addr %s34, 2
          %s575 = sadd.s32 %s573, %s574
          %s576 = smul.addr %s575, 128
          %s577 = scalar_lea.hbm %s4, %s576
          %s579 = sshll.u32 %s561, 4
          %s580 = int_to_ptr.vmem [resolvable:$true] %s579
          %582 = dma.vmem_to_hbm [thread:$0]  %s580, 128, %s577, %s558
        $region52: #{tpu_custom_call.1} parent=35 // pred_fallthru
          _
        // Predicated region
        $region53: #{tpu_custom_call.1} parent=35 // pred_check
          %p583 = pneg %p212
        $region54: #{tpu_custom_call.1} parent=35 // pred_check_branch
          %585 = sbr.rel (%p583) target = $region56
        $region55: #{tpu_custom_call.1} parent=35 // pred_region
          %s587 = ssub.s32 128, 128
          %588 = vsyncadd %s563, %s587
          %s589 = sadd.s32 %s36, %s35
          %s590 = smul.addr %s34, 2
          %s591 = sadd.s32 %s589, %s590
          %s592 = smul.addr %s591, 128
          %s593 = scalar_lea.hbm %s5, %s592
          %s595 = sshll.u32 %s566, 4
          %s596 = int_to_ptr.vmem [resolvable:$true] %s595
          %598 = dma.vmem_to_hbm [thread:$0]  %s596, 128, %s593, %s563
        $region56: #{tpu_custom_call.1} parent=35 // pred_fallthru
          _
      $region36: #{tpu_custom_call.1} parent=5 // pred_fallthru
        _
      %p599 = scmp.le.s32.totalorder 2, %s24
      // Predicated region
      $region57: #{tpu_custom_call.1} parent=5 // pred_check
        %p600 = pneg %p599
      $region58: #{tpu_custom_call.1} parent=5 // pred_check_branch
        %602 = sbr.rel (%p600) target = $region60
      $region59: #{tpu_custom_call.1} parent=5 // pred_region
        %s603 = ssub.s32 %s24, 2
        // Predicated region
        $region61: #{tpu_custom_call.1} parent=59 // pred_check
          %p604 = pneg %p188
        $region62: #{tpu_custom_call.1} parent=59 // pred_check_branch
          %606 = sbr.rel (%p604) target = $region64
        $region63: #{tpu_custom_call.1} parent=59 // pred_region
          %s607 = sand.u32 %s173, 1
          %s608 = scalar_lea.sflag [#allocation4], %s607
          %s609 = sand.u32 %s173, 1
          %s610 = smul.addr %s609, 8
          %s611 = scalar_lea.vmem [#allocation8], %s610
          %612 = dma.done %s608, 128
        $region64: #{tpu_custom_call.1} parent=59 // pred_fallthru
          _
        // Predicated region
        $region65: #{tpu_custom_call.1} parent=59 // pred_check
          %p613 = pneg %p218
        $region66: #{tpu_custom_call.1} parent=59 // pred_check_branch
          %615 = sbr.rel (%p613) target = $region68
        $region67: #{tpu_custom_call.1} parent=59 // pred_region
          %s616 = sand.u32 %s203, 1
          %s617 = scalar_lea.sflag [#allocation10], %s616
          %s618 = sand.u32 %s203, 1
          %s619 = smul.addr %s618, 8
          %s620 = scalar_lea.vmem [#allocation9], %s619
          %621 = dma.done %s617, 128
        $region68: #{tpu_custom_call.1} parent=59 // pred_fallthru
          _
      $region60: #{tpu_custom_call.1} parent=5 // pred_fallthru
        _
    $region6: #{tpu_custom_call.1} parent=1 // loop_footer
      %s28 = sadd.s32 1, %s24
    $region7: #{tpu_custom_call.1} parent=1 // loop_footer_branch
      %23 = sbr.rel target = $region3
    $region8: #{tpu_custom_call.1} parent=1 // loop_exit
      _
    %622 = vsyncpa [#allocation3], 1
    %s623 = scalar_lea.sflag [#allocation3], 1
    %624 = vsyncpa %s623, 1
    %625 = vsyncpa [#allocation6], 1
    %s626 = scalar_lea.sflag [#allocation6], 1
    %627 = vsyncpa %s626, 1
    %628 = vsyncpa [#allocation4], 1
    %s629 = scalar_lea.sflag [#allocation4], 1
    %630 = vsyncpa %s629, 1
    %631 = vsyncpa [#allocation10], 1
    %s632 = scalar_lea.sflag [#allocation10], 1
    %633 = vsyncpa %s632, 1

</llo_original>
